<compile_context>
chip_gen: v7x
topology: tpu7x:2x2x1
jax: 0.10.0
libtpu: 0.0.40
codegen_flags: <defaults>
</compile_context>

<pallas_src>
import math
from functools import partial

import jax
import jax.numpy as jnp
from jax import lax
from jax.experimental import pallas as pl
from jax.experimental.pallas import tpu as pltpu

_MASK_VALUE = -0.7 * float(jnp.finfo(jnp.float32).max)   # finite "-inf" (flash-safe)
_COMPUTE_DTYPE = jnp.bfloat16                              # MXU-native operand dtype


def _round_up(x, m):
    return ((x + m - 1) // m) * m


def _pick_tile(dim, candidates):
    """Largest candidate tile that evenly divides `dim`, else the full dim."""
    for c in candidates:
        if c <= dim and dim % c == 0:
            return c
    return dim


_VMEM_LIMIT_CACHE = None


def _vmem_limit():
    """Generation-aware VMEM budget (v5e/v6e: ~96 MiB of 128; v7x: ~48 MiB of 64)."""
    global _VMEM_LIMIT_CACHE
    if _VMEM_LIMIT_CACHE is None:
        cap = None
        try:
            info = pltpu.get_tpu_info()
            for attr in ("vmem_capacity_bytes", "vmem_bytes"):
                cap = getattr(info, attr, None)
                if cap:
                    break
        except Exception:
            cap = None
        if not cap:
            cap = 64 * 1024 * 1024            # conservative default: v7x-sized VMEM
        _VMEM_LIMIT_CACHE = int(min(cap * 3 // 4, 96 * 1024 * 1024))
    return _VMEM_LIMIT_CACHE


# ---------------------------------------------------------------------------
# Tiled linear (x @ w.T with w in PyTorch (out, in) layout)
# ---------------------------------------------------------------------------

def _matmul_kernel_acc(x_ref, w_ref, o_ref, acc_ref):
    # x: (tm, tk); w: (tn, tk); o: (tm, tn); acc: f32 accumulator (multi K-step path)
    @pl.when(pl.program_id(2) == 0)
    def _():
        acc_ref[...] = jnp.zeros_like(acc_ref)

    acc_ref[...] += lax.dot_general(
        x_ref[...], w_ref[...],
        dimension_numbers=(((1,), (1,)), ((), ())),        # x @ w.T
        preferred_element_type=jnp.float32)

    @pl.when(pl.program_id(2) == pl.num_programs(2) - 1)
    def _():
        o_ref[...] = acc_ref[...].astype(o_ref.dtype)


def _matmul_kernel_single(x_ref, w_ref, o_ref):
    # K fits a single tile: no accumulator scratch, write the result directly.
    o_ref[...] = lax.dot_general(
        x_ref[...], w_ref[...],
        dimension_numbers=(((1,), (1,)), ((), ())),
        preferred_element_type=jnp.float32).astype(o_ref.dtype)


def linear_pallas(x2d, w, out_dtype=None):
    """x2d: (M, K); w: (N, K) PyTorch nn.Linear weight (bias=False) -> (M, N)."""
    if out_dtype is None:
        out_dtype = x2d.dtype
    M, K = x2d.shape
    N, Kw = w.shape
    assert K == Kw

    # Pad M so the MXU sees >=128 rows instead of 8/16-row tiles.
    Mp = _round_up(M, 128)
    if Mp != M:
        x2d = jnp.pad(x2d, ((0, Mp - M), (0, 0)))

    tm = _pick_tile(Mp, (256, 128))
    tn = _pick_tile(N, (512, 256, 128))
    tk = _pick_tile(K, (512, 256, 128))
    ksteps = K // tk
    grid = (Mp // tm, N // tn, ksteps)

    if ksteps > 1:
        kernel = _matmul_kernel_acc
        scratch = [pltpu.VMEM((tm, tn), jnp.float32)]
    else:
        kernel = _matmul_kernel_single
        scratch = []

    out = pl.pallas_call(
        kernel,
        out_shape=jax.ShapeDtypeStruct((Mp, N), out_dtype),
        grid_spec=pltpu.PrefetchScalarGridSpec(
            num_scalar_prefetch=0,
            grid=grid,
            in_specs=[
                pl.BlockSpec((tm, tk), lambda i, j, k: (i, k)),
                pl.BlockSpec((tn, tk), lambda i, j, k: (j, k)),
            ],
            out_specs=pl.BlockSpec((tm, tn), lambda i, j, k: (i, j)),
            scratch_shapes=scratch,
        ),
        compiler_params=pltpu.CompilerParams(
            dimension_semantics=("parallel", "parallel", "arbitrary"),
            vmem_limit_bytes=_vmem_limit()),
    )(x2d, w)
    return out if Mp == M else out[:M]


# ---------------------------------------------------------------------------
# Flash-style sliding-window attention, heads folded, (B, T, heads*D) layout
# ---------------------------------------------------------------------------

def _flash_kernel(q_ref, k_ref, v_ref, o_ref, m_sc, l_sc, acc_sc, *,
                  tq, tk, D, n_head, n_kv_head, n_rep, window, seq_len, kv_steps):
    qi = pl.program_id(1)
    step = pl.program_id(2)

    @pl.when(step == 0)
    def _():
        m_sc[...] = jnp.full_like(m_sc, _MASK_VALUE)
        l_sc[...] = jnp.zeros_like(l_sc)
        acc_sc[...] = jnp.zeros_like(acc_sc)

    q0 = qi * tq
    lo = jnp.maximum(q0 - (window - 1), 0) // tk
    hi = jnp.minimum(q0 + (tq - 1), seq_len - 1) // tk
    ki = lo + step
    c0 = ki * tk
    valid = ki <= hi                                     # dummy revisit steps skipped
    # whole (qi, ki) block strictly inside the causal sliding window -> no mask needed
    fully_inside = (c0 + (tk - 1) <= q0) & (c0 >= q0 + tq - window)

    def process(masked):
        if masked:
            # mask built once per step, shared by every head (no (T,T) mask in HBM)
            offs = (q0 - c0) + (lax.broadcasted_iota(jnp.int32, (tq, tk), 0)
                                - lax.broadcasted_iota(jnp.int32, (tq, tk), 1))
            in_win = (offs >= 0) & (offs < window)
        for g in range(n_kv_head):
            k_g = k_ref[0, :, g * D:(g + 1) * D]          # (tk, D) shared by n_rep q heads
            v_g = v_ref[0, :, g * D:(g + 1) * D]
            for r in range(n_rep):
                h = g * n_rep + r
                q_h = q_ref[0, :, h * D:(h + 1) * D]      # (tq, D); scale folded into W_q
                s = lax.dot_general(q_h, k_g,
                                    dimension_numbers=(((1,), (1,)), ((), ())),
                                    preferred_element_type=jnp.float32)   # (tq, tk) f32
                if masked:
                    s = jnp.where(in_win, s, _MASK_VALUE)
                m_prev = m_sc[:, h:h + 1]
                m_next = jnp.maximum(m_prev, jnp.max(s, axis=-1, keepdims=True))
                alpha = jnp.exp(m_prev - m_next)
                p = jnp.exp(s - m_next)
                if masked:
                    p = jnp.where(in_win, p, 0.0)         # robust: no exp-underflow reliance
                l_sc[:, h:h + 1] = alpha * l_sc[:, h:h + 1] + jnp.sum(p, axis=-1,
                                                                      keepdims=True)
                acc_sc[:, h * D:(h + 1) * D] = (
                    alpha * acc_sc[:, h * D:(h + 1) * D]
                    + jnp.dot(p.astype(v_g.dtype), v_g,
                              preferred_element_type=jnp.float32))
                m_sc[:, h:h + 1] = m_next

    if window >= tq + tk - 1:
        # Wide window: most blocks are fully in-window -> unmasked fast path.
        @pl.when(valid & fully_inside)
        def _():
            process(False)

        @pl.when(valid & jnp.logical_not(fully_inside))
        def _():
            process(True)
    else:
        @pl.when(valid)
        def _():
            process(True)

    @pl.when(step == kv_steps - 1)
    def _():
        cols = []
        for h in range(n_head):
            inv = pl.reciprocal(l_sc[:, h:h + 1], approx=True)
            cols.append(acc_sc[:, h * D:(h + 1) * D] * inv)
        # single lane-dense store of the whole (tq, n_head*D) tile
        o_ref[0] = jnp.concatenate(cols, axis=-1).astype(o_ref.dtype)


def flash_sliding_window_attention(q, k, v, *, n_head, n_kv_head, window_size):
    """q: (B, T, n_head*D); k, v: (B, T, n_kv_head*D). Returns (B, T, n_head*D)."""
    B, T, C = q.shape
    D = C // n_head
    n_rep = n_head // n_kv_head
    KC = n_kv_head * D
    window = max(int(window_size), 1)

    tq = _pick_tile(T, (256, 128))
    tk = _pick_tile(T, tuple(c for c in (256, 128) if c <= window))  # prefer tk <= window
    nq = T // tq

    def _bounds(q0):
        lo = max(q0 - (window - 1), 0) // tk
        hi = min(q0 + tq - 1, T - 1) // tk
        return lo, hi

    # exact worst-case number of kv blocks any q tile touches (no dummy tail steps)
    kv_steps = max(_bounds(qi * tq)[1] - _bounds(qi * tq)[0] + 1 for qi in range(nq))

    def q_map(b, qi, s):
        return (b, qi, 0)

    def kv_map(b, qi, s):
        q0 = qi * tq
        lo = jnp.maximum(q0 - (window - 1), 0) // tk
        hi = jnp.minimum(q0 + (tq - 1), T - 1) // tk
        # clamped revisit -> no extra DMA for the (rare) dummy steps near sequence start
        return (b, jnp.minimum(lo + s, hi), 0)

    kernel = partial(_flash_kernel, tq=tq, tk=tk, D=D, n_head=n_head,
                     n_kv_head=n_kv_head, n_rep=n_rep, window=window,
                     seq_len=T, kv_steps=kv_steps)

    return pl.pallas_call(
        kernel,
        out_shape=jax.ShapeDtypeStruct((B, T, C), q.dtype),
        grid_spec=pltpu.PrefetchScalarGridSpec(
            num_scalar_prefetch=0,
            grid=(B, nq, kv_steps),
            in_specs=[
                pl.BlockSpec((1, tq, C), q_map),    # all q heads resident per q tile
                pl.BlockSpec((1, tk, KC), kv_map),  # all kv heads resident per kv block
                pl.BlockSpec((1, tk, KC), kv_map),
            ],
            out_specs=pl.BlockSpec((1, tq, C), q_map),
            scratch_shapes=[
                pltpu.VMEM((tq, n_head), jnp.float32),   # running max per head
                pltpu.VMEM((tq, n_head), jnp.float32),   # running denom per head
                pltpu.VMEM((tq, C), jnp.float32),        # f32 output accumulator
            ],
        ),
        compiler_params=pltpu.CompilerParams(
            dimension_semantics=("parallel", "parallel", "arbitrary"),
            vmem_limit_bytes=_vmem_limit()),
    )(q, k, v)


# ---------------------------------------------------------------------------
# Module-level glue (plain JAX; no transposes anywhere)
# ---------------------------------------------------------------------------

def sliding_window_attention(x, w_attn, w_proj, n_head, n_kv_head, window_size):
    B, T, C = x.shape
    head_dim = C // n_head
    q_size = n_head * head_dim
    kv_size = n_kv_head * head_dim
    scale = 1.0 / math.sqrt(head_dim)

    x2d = x.reshape(B * T, C).astype(_COMPUTE_DTYPE)
    # Split the fused QKV weight; fold the softmax scale into the Q projection (free).
    w_q = (w_attn[:q_size] * scale).astype(_COMPUTE_DTYPE)
    w_k = w_attn[q_size:q_size + kv_size].astype(_COMPUTE_DTYPE)
    w_v = w_attn[q_size + kv_size:].astype(_COMPUTE_DTYPE)

    # Projections produce q/k/v directly in the (B, T, heads*head_dim) layout that the
    # flash kernel consumes -- no jnp.transpose / repeat_kv HBM round trips.
    q = linear_pallas(x2d, w_q).reshape(B, T, q_size)
    k = linear_pallas(x2d, w_k).reshape(B, T, kv_size)
    v = linear_pallas(x2d, w_v).reshape(B, T, kv_size)

    # TODO(synk): rope.apply_rotary_emb (freqs_cis) not implemented; forward assumes freqs_cis=None.
    # TODO(synk): arbitrary user-supplied boolean masks / start_pos KV-cache not plumbed; the
    #             in-kernel iota mask reproduces the module's causal sliding window (all-True mask).

    y = flash_sliding_window_attention(q, k, v, n_head=n_head, n_kv_head=n_kv_head,
                                       window_size=window_size)            # (B, T, C)

    out = linear_pallas(y.reshape(B * T, C), w_proj.astype(_COMPUTE_DTYPE),
                        out_dtype=x.dtype)
    return out.reshape(B, T, C)


# ---------------------------------------------------------------------------
# Pure-JAX reference (mirrors the module with an all-True mask)
# ---------------------------------------------------------------------------

def reference(x, w_attn, w_proj, n_head, n_kv_head, window_size):
    B, T, C = x.shape
    head_dim = C // n_head
    n_rep = n_head // n_kv_head
    q_size = n_head * head_dim
    kv_size = n_kv_head * head_dim
    qkv = x @ w_attn.T
    q = qkv[..., :q_size].reshape(B, T, n_head, head_dim)
    k = qkv[..., q_size:q_size + kv_size].reshape(B, T, n_kv_head, head_dim)
    v = qkv[..., q_size + kv_size:].reshape(B, T, n_kv_head, head_dim)
    k = jnp.repeat(k, n_rep, axis=2)
    v = jnp.repeat(v, n_rep, axis=2)
    q, k, v = (jnp.transpose(t, (0, 2, 1, 3)) for t in (q, k, v))
    rows = jnp.arange(T)[:, None]
    cols = jnp.arange(T)[None, :]
    in_window = (cols <= rows) & (cols > rows - window_size)
    bias = jnp.where(in_window, 0.0, -jnp.inf).astype(jnp.float32)
    s = jnp.einsum("bhqd,bhkd->bhqk", q, k) / math.sqrt(head_dim) + bias
    p = jax.nn.softmax(s, axis=-1)
    y = jnp.einsum("bhqk,bhkd->bhqd", p, v)
    y = jnp.transpose(y, (0, 2, 1, 3)).reshape(B, T, C)
    return y @ w_proj.T


# ---------------------------------------------------------------------------
# Main
# ---------------------------------------------------------------------------

if __name__ == "__main__":
    def run_case(B, T, n_embd, n_head, n_kv_head, window_size):
        head_dim = n_embd // n_head
        key = jax.random.PRNGKey(0)
        k_x, k_wa, k_wp = jax.random.split(key, 3)
        std = 1.0 / math.sqrt(n_embd)
        x = jax.random.normal(k_x, (B, T, n_embd), dtype=jnp.float32)
        # PyTorch Linear weight layout: (out_features, in_features), bias=False
        w_attn = std * jax.random.normal(
            k_wa, ((n_head + 2 * n_kv_head) * head_dim, n_embd), dtype=jnp.float32)
        w_proj = std * jax.random.normal(k_wp, (n_embd, n_embd), dtype=jnp.float32)

        out = sliding_window_attention(x, w_attn, w_proj, n_head, n_kv_head, window_size)
        out = jax.block_until_ready(out)

        ref = reference(x, w_attn, w_proj, n_head, n_kv_head, window_size)
        assert out.shape == (B, T, n_embd)
        assert out.dtype == x.dtype
        max_err = float(jnp.max(jnp.abs(out - ref)))
        assert jnp.allclose(out, ref, atol=2.5e-2, rtol=2.5e-2), \
            f"mismatch vs reference (max abs err {max_err:.4e})"

    # small config consistent with the module's __init__
    run_case(B=2, T=8, n_embd=32, n_head=4, n_kv_head=2, window_size=4)
    # larger config exercising the tiled matmuls + multi-block flash path
    run_case(B=1, T=512, n_embd=256, n_head=4, n_kv_head=2, window_size=128)

    print("KERNEL_OK")
</pallas_src>

<mosaic_0001>
module attributes {stable_mosaic.version = 11 : i64} {
  func.func @_matmul_kernel_single(%arg0: i32, %arg1: i32, %arg2: i32, %arg3: memref<128x32xbf16, #tpu.memory_space<vmem>>, %arg4: memref<32x32xbf16, #tpu.memory_space<vmem>>, %arg5: memref<128x32xbf16, #tpu.memory_space<vmem>>) attributes {dimension_semantics = [#tpu.dimension_semantics<parallel>, #tpu.dimension_semantics<parallel>, #tpu.dimension_semantics<arbitrary>], iteration_bounds = array<i64: 1, 1, 1>, scalar_prefetch = 0 : i64, scratch_operands = 0 : i64, tpu.core_type = #tpu.core_type<tc>, window_params = [{transform_indices = @transform_0, window_bounds = array<i64: 128, 32>}, {transform_indices = @transform_1, window_bounds = array<i64: 32, 32>}, {transform_indices = @transform_2, window_bounds = array<i64: 128, 32>}]} {
    %c0 = arith.constant 0 : index
    %c0_0 = arith.constant 0 : index
    %0 = vector.load %arg3[%c0, %c0_0] : memref<128x32xbf16, #tpu.memory_space<vmem>>, vector<128x32xbf16>
    %c0_1 = arith.constant 0 : index
    %c0_2 = arith.constant 0 : index
    %1 = vector.load %arg4[%c0_1, %c0_2] : memref<32x32xbf16, #tpu.memory_space<vmem>>, vector<32x32xbf16>
    %cst = arith.constant dense<0.000000e+00> : vector<128x32xf32>
    %2 = tpu.matmul %0, %1, %cst {dimension_numbers = #tpu.dot_dimension_numbers<[1], [1], [0], [0], [0, 0, 1, 0], [], []>} : vector<128x32xbf16>, vector<32x32xbf16>, vector<128x32xf32> -> vector<128x32xf32>
    %3 = arith.truncf %2 : vector<128x32xf32> to vector<128x32xbf16>
    %c0_3 = arith.constant 0 : index
    %c0_4 = arith.constant 0 : index
    %4 = vector.load %arg5[%c0_3, %c0_4] : memref<128x32xbf16, #tpu.memory_space<vmem>>, vector<128x32xbf16>
    tpu.vector_store %arg5[%c0_3, %c0_4], %3 {strides = array<i32>} : memref<128x32xbf16, #tpu.memory_space<vmem>>, vector<128x32xbf16>,
    return
  }
  func.func @transform_0(%arg0: i32, %arg1: i32, %arg2: i32) -> (i32, i32) {
    %c0_i32 = arith.constant 0 : i32
    return %arg0, %arg2 : i32, i32
  }
  func.func @transform_1(%arg0: i32, %arg1: i32, %arg2: i32) -> (i32, i32) {
    %c0_i32 = arith.constant 0 : i32
    return %arg1, %arg2 : i32, i32
  }
  func.func @transform_2(%arg0: i32, %arg1: i32, %arg2: i32) -> (i32, i32) {
    %c0_i32 = arith.constant 0 : i32
    return %arg0, %arg1 : i32, i32
  }
}

</mosaic_0001>

<llo_original>
// kernel: tpu_custom_call.1
$region0: #{tpu_custom_call.1}
  #allocation0 [shape = 'u32[]', space=smem, size = 0x4, offset = 0x4, fixed_abs, tag = 'smem constant byte address 0x4 - core index']
  #allocation1 [shape = 'u32[144,128]{1,0:T(1,128)}', space=vmem, size = 0x12000, scoped, tag = 'internal scratch']
  %s0 = inlined_call_operand.vmem [shape: bf16[128,32], index: 0, kind: input, shape index: {}]
  %s1 = inlined_call_operand.vmem [shape: bf16[32,32], index: 1, kind: input, shape index: {}]
  %s2 = inlined_call_operand.vmem [shape: bf16[128,32], index: 2, kind: output, shape index: {}]
  %s3 = sld [smem:[#allocation0]]
  $region18: #{tpu_custom_call.1} parent=0
    _
  %s5 = ssub.s32 1, %s3
  %s6 = scalar_select 0, %s5, %s3
  // Predicated region
  $region2: #{tpu_custom_call.1} parent=0 // pred_check
    _
  $region3: #{tpu_custom_call.1} parent=0 // pred_check_branch
    %8 = sbr.rel (0) target = $region5
  $region4: #{tpu_custom_call.1} parent=0 // pred_region
    _
  $region5: #{tpu_custom_call.1} parent=0 // pred_fallthru
    _
  // Predicated region
  $region6: #{tpu_custom_call.1} parent=0 // pred_check
    _
  $region7: #{tpu_custom_call.1} parent=0 // pred_check_branch
    %10 = sbr.rel (0) target = $region9
  $region8: #{tpu_custom_call.1} parent=0 // pred_region
    _
  $region9: #{tpu_custom_call.1} parent=0 // pred_fallthru
    _
  %v12 = vld [vmem:[%s0] sm:$0xf]
  %v13 = vld [vmem:[%s0 + $0x4] sm:$0xf]
  %v14 = vld [vmem:[%s0 + $0x8] sm:$0xf]
  %v15 = vld [vmem:[%s0 + $0xc] sm:$0xf]
  %v16 = vld [vmem:[%s0 + $0x10] sm:$0xf]
  %v17 = vld [vmem:[%s0 + $0x14] sm:$0xf]
  %v18 = vld [vmem:[%s0 + $0x18] sm:$0xf]
  %v19 = vld [vmem:[%s0 + $0x1c] sm:$0xf]
  %v20 = vld [vmem:[%s0 + $0x20] sm:$0xf]
  %v21 = vld [vmem:[%s0 + $0x24] sm:$0xf]
  %v22 = vld [vmem:[%s0 + $0x28] sm:$0xf]
  %v23 = vld [vmem:[%s0 + $0x2c] sm:$0xf]
  %v24 = vld [vmem:[%s0 + $0x30] sm:$0xf]
  %v25 = vld [vmem:[%s0 + $0x34] sm:$0xf]
  %v26 = vld [vmem:[%s0 + $0x38] sm:$0xf]
  %v27 = vld [vmem:[%s0 + $0x3c] sm:$0xf]
  %v28 = vld [vmem:[%s1] sm:$0xf]
  %v29 = vld [vmem:[%s1 + $0x4] sm:$0xf]
  %v30 = vld [vmem:[%s1 + $0x8] sm:$0xf]
  %v31 = vld [vmem:[%s1 + $0xc] sm:$0xf]
  %v48 = vunpack.c.l.b16 %v12
  %v49 = vunpack.c.l.b16 %v13
  %v50 = vunpack.c.l.b16 %v14
  %v51 = vunpack.c.l.b16 %v15
  %v52 = vunpack.c.l.b16 %v16
  %v53 = vunpack.c.l.b16 %v17
  %v54 = vunpack.c.l.b16 %v18
  %v55 = vunpack.c.l.b16 %v19
  %v56 = vunpack.c.l.b16 %v20
  %v57 = vunpack.c.l.b16 %v21
  %v58 = vunpack.c.l.b16 %v22
  %v59 = vunpack.c.l.b16 %v23
  %v60 = vunpack.c.l.b16 %v24
  %v61 = vunpack.c.l.b16 %v25
  %v62 = vunpack.c.l.b16 %v26
  %v63 = vunpack.c.l.b16 %v27
  %v64 = vpack.c.b16 %v49, %v48
  %v65 = vpack.c.b16 %v51, %v50
  %v66 = vpack.c.b16 %v53, %v52
  %v67 = vpack.c.b16 %v55, %v54
  %v68 = vpack.c.b16 %v57, %v56
  %v69 = vpack.c.b16 %v59, %v58
  %v70 = vpack.c.b16 %v61, %v60
  %v71 = vpack.c.b16 %v63, %v62
  %v76 = vunpack.c.l.b16 %v28
  %v77 = vunpack.c.l.b16 %v29
  %v78 = vunpack.c.l.b16 %v30
  %v79 = vunpack.c.l.b16 %v31
  %v80 = vpack.c.b16 %v77, %v76
  %v81 = vpack.c.b16 %v79, %v78
  %vm82 = vcmask 261120
  %v84 = vsel %vm82, %v64, 0
  %v87 = vsel %vm82, %v65, 0
  %v90 = vsel %vm82, %v66, 0
  %v93 = vsel %vm82, %v67, 0
  %v96 = vsel %vm82, %v68, 0
  %v99 = vsel %vm82, %v69, 0
  %v102 = vsel %vm82, %v70, 0
  %v105 = vsel %vm82, %v71, 0
  %v108 = vsel %vm82, %v80, 0
  %v111 = vsel %vm82, %v81, 0
  %113 = vmatprep.subr.bf16.mxu0 0
  %114 = vmatpush1.bf16.xpose.msra.mxu0 %v108
  %115 = vmatprep.subr.bf16.mxu0 0
  %116 = vmatpush1.bf16.xpose.msra.mxu0 %v111
  %117 = vmatprep.subr.bf16.mxu0 0
  %118 = vmatpush1.bf16.xpose.msra.mxu0 0
  %119 = vmatprep.subr.bf16.mxu0 0
  %120 = vmatpush1.bf16.xpose.msra.mxu0 0
  %121 = vmatprep.subr.bf16.mxu0 0
  %122 = vmatpush1.bf16.xpose.msra.mxu0 0
  %123 = vmatprep.subr.bf16.mxu0 0
  %124 = vmatpush1.bf16.xpose.msra.mxu0 0
  %125 = vmatprep.subr.bf16.mxu0 0
  %126 = vmatpush1.bf16.xpose.msra.mxu0 0
  %127 = vmatprep.subr.bf16.mxu0 0
  %128 = vmatpush1.bf16.xpose.msra.mxu0 0
  %129 = vmatprep.subr.bf16.mxu0 0
  %130 = vmatpush1.bf16.xpose.msra.mxu0 0
  %131 = vmatprep.subr.bf16.mxu0 0
  %132 = vmatpush1.bf16.xpose.msra.mxu0 0
  %133 = vmatprep.subr.bf16.mxu0 0
  %134 = vmatpush1.bf16.xpose.msra.mxu0 0
  %135 = vmatprep.subr.bf16.mxu0 0
  %136 = vmatpush1.bf16.xpose.msra.mxu0 0
  %137 = vmatprep.subr.bf16.mxu0 0
  %138 = vmatpush1.bf16.xpose.msra.mxu0 0
  %139 = vmatprep.subr.bf16.mxu0 0
  %140 = vmatpush1.bf16.xpose.msra.mxu0 0
  %141 = vmatprep.subr.bf16.mxu0 0
  %142 = vmatpush1.bf16.xpose.msra.mxu0 0
  %143 = vmatprep.subr.bf16.mxu0 0
  %144 = vmatpush1.bf16.xpose.msra.mxu0 0
  %145 = vmatprep.mubr.bf16.mxu0 0
  %146 = vmatmul.mubr.bf16.gmra.mrb[0].mxu0 %v84
  %v147 = vpop.f32.mrb[0].mxu0
  %v148 = vadd.f32 0.0, %v147
  %v149 = vpop.f32.mrb[0].mxu0
  %v150 = vpop.f32.mrb[0].mxu0
  %v151 = vadd.f32 0.0, %v150
  %v152 = vpop.f32.mrb[0].mxu0
  %153 = vmatprep.mubr.bf16.mxu0 0
  %154 = vmatmul.mubr.bf16.gmra.mrb[0].mxu0 %v87
  %v155 = vpop.f32.mrb[0].mxu0
  %v156 = vadd.f32 0.0, %v155
  %v157 = vpop.f32.mrb[0].mxu0
  %v158 = vpop.f32.mrb[0].mxu0
  %v159 = vadd.f32 0.0, %v158
  %v160 = vpop.f32.mrb[0].mxu0
  %161 = vmatprep.mubr.bf16.mxu0 0
  %162 = vmatmul.mubr.bf16.gmra.mrb[0].mxu0 %v90
  %v163 = vpop.f32.mrb[0].mxu0
  %v164 = vadd.f32 0.0, %v163
  %v165 = vpop.f32.mrb[0].mxu0
  %v166 = vpop.f32.mrb[0].mxu0
  %v167 = vadd.f32 0.0, %v166
  %v168 = vpop.f32.mrb[0].mxu0
  %169 = vmatprep.mubr.bf16.mxu0 0
  %170 = vmatmul.mubr.bf16.gmra.mrb[0].mxu0 %v93
  %v171 = vpop.f32.mrb[0].mxu0
  %v172 = vadd.f32 0.0, %v171
  %v173 = vpop.f32.mrb[0].mxu0
  %v174 = vpop.f32.mrb[0].mxu0
  %v175 = vadd.f32 0.0, %v174
  %v176 = vpop.f32.mrb[0].mxu0
  %177 = vmatprep.mubr.bf16.mxu0 0
  %178 = vmatmul.mubr.bf16.gmra.mrb[0].mxu0 %v96
  %v179 = vpop.f32.mrb[0].mxu0
  %v180 = vadd.f32 0.0, %v179
  %v181 = vpop.f32.mrb[0].mxu0
  %v182 = vpop.f32.mrb[0].mxu0
  %v183 = vadd.f32 0.0, %v182
  %v184 = vpop.f32.mrb[0].mxu0
  %185 = vmatprep.mubr.bf16.mxu0 0
  %186 = vmatmul.mubr.bf16.gmra.mrb[0].mxu0 %v99
  %v187 = vpop.f32.mrb[0].mxu0
  %v188 = vadd.f32 0.0, %v187
  %v189 = vpop.f32.mrb[0].mxu0
  %v190 = vpop.f32.mrb[0].mxu0
  %v191 = vadd.f32 0.0, %v190
  %v192 = vpop.f32.mrb[0].mxu0
  %193 = vmatprep.mubr.bf16.mxu0 0
  %194 = vmatmul.mubr.bf16.gmra.mrb[0].mxu0 %v102
  %v195 = vpop.f32.mrb[0].mxu0
  %v196 = vadd.f32 0.0, %v195
  %v197 = vpop.f32.mrb[0].mxu0
  %v198 = vpop.f32.mrb[0].mxu0
  %v199 = vadd.f32 0.0, %v198
  %v200 = vpop.f32.mrb[0].mxu0
  %201 = vmatprep.mubr.bf16.mxu0 0
  %202 = vmatmul.mubr.bf16.gmra.mrb[0].mxu0 %v105
  %v203 = vpop.f32.mrb[0].mxu0
  %v204 = vadd.f32 0.0, %v203
  %v205 = vpop.f32.mrb[0].mxu0
  %v206 = vpop.f32.mrb[0].mxu0
  %v207 = vadd.f32 0.0, %v206
  %v208 = vpop.f32.mrb[0].mxu0
  %209 = vdwg.mxu0
  %v210 = vpack.c.bf16 %v151, %v148
  %v211 = vpack.c.bf16 %v159, %v156
  %v212 = vpack.c.bf16 %v167, %v164
  %v213 = vpack.c.bf16 %v175, %v172
  %v214 = vpack.c.bf16 %v183, %v180
  %v215 = vpack.c.bf16 %v191, %v188
  %v216 = vpack.c.bf16 %v199, %v196
  %v217 = vpack.c.bf16 %v207, %v204
  %v226 = vunpack.c.l.b16 %v210
  %v227 = vunpack.c.h.b16 %v210
  %v228 = vunpack.c.l.b16 %v211
  %v229 = vunpack.c.h.b16 %v211
  %v230 = vunpack.c.l.b16 %v212
  %v231 = vunpack.c.h.b16 %v212
  %v232 = vunpack.c.l.b16 %v213
  %v233 = vunpack.c.h.b16 %v213
  %v234 = vunpack.c.l.b16 %v214
  %v235 = vunpack.c.h.b16 %v214
  %v236 = vunpack.c.l.b16 %v215
  %v237 = vunpack.c.h.b16 %v215
  %v238 = vunpack.c.l.b16 %v216
  %v239 = vunpack.c.h.b16 %v216
  %v240 = vunpack.c.l.b16 %v217
  %v241 = vunpack.c.h.b16 %v217
  %v242 = vpack.c.b16 %v226, %v226
  %v243 = vpack.c.b16 %v227, %v227
  %v244 = vpack.c.b16 %v228, %v228
  %v245 = vpack.c.b16 %v229, %v229
  %v246 = vpack.c.b16 %v230, %v230
  %v247 = vpack.c.b16 %v231, %v231
  %v248 = vpack.c.b16 %v232, %v232
  %v249 = vpack.c.b16 %v233, %v233
  %v250 = vpack.c.b16 %v234, %v234
  %v251 = vpack.c.b16 %v235, %v235
  %v252 = vpack.c.b16 %v236, %v236
  %v253 = vpack.c.b16 %v237, %v237
  %v254 = vpack.c.b16 %v238, %v238
  %v255 = vpack.c.b16 %v239, %v239
  %v256 = vpack.c.b16 %v240, %v240
  %v257 = vpack.c.b16 %v241, %v241
  %vm274 = vcmask 257024
  %275 = vst.msk [vmem:[%s2] sm:$0xf] %vm274, %v242
  %276 = vst.msk [vmem:[%s2 + $0x4] sm:$0xf] %vm274, %v243
  %277 = vst.msk [vmem:[%s2 + $0x8] sm:$0xf] %vm274, %v244
  %278 = vst.msk [vmem:[%s2 + $0xc] sm:$0xf] %vm274, %v245
  %279 = vst.msk [vmem:[%s2 + $0x10] sm:$0xf] %vm274, %v246
  %280 = vst.msk [vmem:[%s2 + $0x14] sm:$0xf] %vm274, %v247
  %281 = vst.msk [vmem:[%s2 + $0x18] sm:$0xf] %vm274, %v248
  %282 = vst.msk [vmem:[%s2 + $0x1c] sm:$0xf] %vm274, %v249
  %283 = vst.msk [vmem:[%s2 + $0x20] sm:$0xf] %vm274, %v250
  %284 = vst.msk [vmem:[%s2 + $0x24] sm:$0xf] %vm274, %v251
  %285 = vst.msk [vmem:[%s2 + $0x28] sm:$0xf] %vm274, %v252
  %286 = vst.msk [vmem:[%s2 + $0x2c] sm:$0xf] %vm274, %v253
  %287 = vst.msk [vmem:[%s2 + $0x30] sm:$0xf] %vm274, %v254
  %288 = vst.msk [vmem:[%s2 + $0x34] sm:$0xf] %vm274, %v255
  %289 = vst.msk [vmem:[%s2 + $0x38] sm:$0xf] %vm274, %v256
  %290 = vst.msk [vmem:[%s2 + $0x3c] sm:$0xf] %vm274, %v257
  // Predicated region
  $region10: #{tpu_custom_call.1} parent=0 // pred_check
    _
  $region11: #{tpu_custom_call.1} parent=0 // pred_check_branch
    %292 = sbr.rel (0) target = $region13
  $region12: #{tpu_custom_call.1} parent=0 // pred_region
    _
  $region13: #{tpu_custom_call.1} parent=0 // pred_fallthru
    _
  // Predicated region
  $region14: #{tpu_custom_call.1} parent=0 // pred_check
    _
  $region15: #{tpu_custom_call.1} parent=0 // pred_check_branch
    %294 = sbr.rel (0) target = $region17
  $region16: #{tpu_custom_call.1} parent=0 // pred_region
    _
  $region17: #{tpu_custom_call.1} parent=0 // pred_fallthru
    _

</llo_original>
